<compile_context>
chip_gen: v7x
topology: tpu7x:2x2x1
jax: 0.10.0
libtpu: 0.0.40
codegen_flags: <defaults>
</compile_context>

<pallas_src>
import jax
import jax.numpy as jnp
from jax.experimental import pallas as pl
from jax.experimental.pallas import tpu as pltpu

LANE = 128        # padded feature width for hidden layers (one native MXU tile)
NUM_LAYERS = 7    # 6 hidden layers (ReLU) + 1 predict layer (linear)


def mlp_kernel(x_ref, w_ref, b_ref, o_ref):
    """Push one (TB, nf_pad) batch tile through all 7 padded layers.

    x_ref: (TB, nf_pad)     input tile, compute dtype (no 128-lane padding)
    w_ref: (7, 128, 128)    zero-padded weights, (in, out) layout, compute dtype
    b_ref: (7, 1, 128)      zero-padded biases, f32 (added after f32 accumulation)
    o_ref: (TB, 128)        lane-dense output tile (true outputs in cols [:n_output])
    """
    wdt = w_ref.dtype
    nf = x_ref.shape[1]
    # Layer 1: contract only the nf live input lanes against the first nf rows
    # of the padded weight slab (rows >= n_feature are zero anyway).
    w0 = w_ref[0][:nf, :]
    h = jnp.dot(x_ref[...].astype(wdt), w0,
                preferred_element_type=jnp.float32) + b_ref[0]
    h = jnp.maximum(h, 0.0)
    # Layers 2..7: full 128x128 padded matmuls; padded lanes stay exactly zero.
    for i in range(1, NUM_LAYERS):
        y = jnp.dot(h.astype(wdt), w_ref[i],
                    preferred_element_type=jnp.float32) + b_ref[i]
        h = jnp.maximum(y, 0.0) if i < NUM_LAYERS - 1 else y   # no ReLU on predict
    o_ref[...] = h.astype(o_ref.dtype)


def _round_up(n, m):
    return ((n + m - 1) // m) * m


def _pick_tile(B, block_batch):
    """Pick (tb, b_pad): tb multiple of 8, b_pad multiple of tb, waste < 512 rows."""
    block_batch = max(8, (block_batch // 8) * 8)
    b8 = _round_up(B, 8)
    if b8 <= block_batch:
        return b8, b8                     # single tile, minimal padding
    b_pad = _round_up(B, 512)             # bound padding waste to < 512 rows
    tb = block_batch
    while tb >= 512:
        if b_pad % tb == 0:
            return tb, b_pad
        tb //= 2
    if block_batch >= 512:
        return 512, b_pad
    return block_batch, _round_up(B, block_batch)


def pack_params(params, dtype=jnp.bfloat16):
    """Pack 7 (W, b) pairs into zero-padded (7,128,128) / (7,1,128) slabs."""
    L = len(params)
    w_stack = jnp.zeros((L, LANE, LANE), jnp.float32)
    b_stack = jnp.zeros((L, 1, LANE), jnp.float32)
    for i, (w, b) in enumerate(params):
        fin, fout = w.shape
        w_stack = w_stack.at[i, :fin, :fout].set(w.astype(jnp.float32))
        b_stack = b_stack.at[i, 0, :fout].set(b.reshape(-1).astype(jnp.float32))
    return w_stack.astype(dtype), b_stack   # biases stay f32 (post-accumulate add)


def net_forward(x, params, *, block_batch=2048, compute_dtype=jnp.bfloat16,
                out_dtype=jnp.float32):
    """x: (B, n_feature); params: list of 7 (W(in,out), b(1,out)) pairs.

    compute_dtype=jnp.bfloat16 (default) uses the bf16 MXU rate and halves
    input DMA; accumulation stays f32.  compute_dtype=jnp.float32 is bit-exact
    vs. a plain-JAX f32 reference.
    """
    B, n_feature = x.shape
    n_output = params[-1][0].shape[1]
    w_stack, b_stack = pack_params(params, dtype=compute_dtype)

    nf_pad = _round_up(n_feature, 16)     # keep bf16 sublane packing aligned
    tb, b_pad = _pick_tile(B, block_batch)

    if (b_pad, nf_pad) == (B, n_feature):
        x_pad = x.astype(compute_dtype)   # no extra HBM pad pass needed
    else:
        x_pad = jnp.zeros((b_pad, nf_pad), compute_dtype)
        x_pad = x_pad.at[:B, :n_feature].set(x.astype(compute_dtype))

    grid = (b_pad // tb,)
    out = pl.pallas_call(
        mlp_kernel,
        out_shape=jax.ShapeDtypeStruct((b_pad, LANE), out_dtype),
        grid_spec=pltpu.PrefetchScalarGridSpec(
            num_scalar_prefetch=0,
            grid=grid,
            in_specs=[
                # streamed batch tile; last block dim == full array dim (legal)
                pl.BlockSpec((tb, nf_pad), lambda i: (i, 0)),
                # weights / biases: constant index_map -> resident across grid
                pl.BlockSpec((NUM_LAYERS, LANE, LANE), lambda i: (0, 0, 0)),
                pl.BlockSpec((NUM_LAYERS, 1, LANE), lambda i: (0, 0, 0)),
            ],
            out_specs=pl.BlockSpec((tb, LANE), lambda i: (i, 0)),
        ),
        compiler_params=pltpu.CompilerParams(
            dimension_semantics=("parallel",),
            vmem_limit_bytes=32 * 1024 * 1024,
        ),
    )(x_pad, w_stack, b_stack)

    # Slice away batch / lane padding.
    return out[:B, :n_output]


def init_params(key, n_feature, n_output):
    """Deterministic init mimicking PyTorch Linear default (+-1/sqrt(fan_in))."""
    dims = [n_feature, 128, 64, 32, 16, 8, 4, n_output]
    params = []
    for i in range(len(dims) - 1):
        fan_in, fan_out = dims[i], dims[i + 1]
        key, kw, kb = jax.random.split(key, 3)
        bound = 1.0 / jnp.sqrt(fan_in)
        w = jax.random.uniform(kw, (fan_in, fan_out), jnp.float32, -bound, bound)
        b = jax.random.uniform(kb, (1, fan_out), jnp.float32, -bound, bound)
        params.append((w, b))
    return params


def _jax_reference(x, params):
    h = x
    for i, (w, b) in enumerate(params):
        h = h @ w + b
        if i < len(params) - 1:
            h = jnp.maximum(h, 0.0)
    return h


if __name__ == "__main__":
    key = jax.random.PRNGKey(0)
    n_feature, n_output, batch = 16, 3, 8

    kx, kp, kx2 = jax.random.split(key, 3)
    x = jax.random.normal(kx, (batch, n_feature), jnp.float32)
    params = init_params(kp, n_feature, n_output)
    ref = _jax_reference(x, params)

    # 1) f32 path: bit-exact semantics check.
    out_f32 = net_forward(x, params, compute_dtype=jnp.float32)
    jax.block_until_ready(out_f32)
    assert out_f32.shape == (batch, n_output)
    assert jnp.allclose(out_f32, ref, atol=1e-5, rtol=1e-5), "f32 mismatch vs JAX reference"

    # 2) default bf16 path: fast path, looser tolerance for bf16 rounding.
    out_bf16 = net_forward(x, params)
    jax.block_until_ready(out_bf16)
    assert out_bf16.shape == (batch, n_output)
    assert jnp.allclose(out_bf16, ref, atol=5e-2, rtol=5e-2), "bf16 mismatch vs JAX reference"

    # 3) multi-tile batch grid (exercises tile selection / batch padding path).
    big_b = 2056  # > block_batch -> grid of several (512,*) tiles
    x_big = jax.random.normal(kx2, (big_b, n_feature), jnp.float32)
    ref_big = _jax_reference(x_big, params)
    out_big = net_forward(x_big, params)
    jax.block_until_ready(out_big)
    assert out_big.shape == (big_b, n_output)
    assert jnp.allclose(out_big, ref_big, atol=5e-2, rtol=5e-2), "multi-tile mismatch"

    print("KERNEL_OK")
</pallas_src>

<mosaic_0001>
module attributes {stable_mosaic.version = 11 : i64} {
  func.func @mlp_kernel(%arg0: i32, %arg1: memref<8x16xf32, #tpu.memory_space<vmem>>, %arg2: memref<7x128x128xf32, #tpu.memory_space<vmem>>, %arg3: memref<7x1x128xf32, #tpu.memory_space<vmem>>, %arg4: memref<8x128xf32, #tpu.memory_space<vmem>>) attributes {dimension_semantics = [#tpu.dimension_semantics<parallel>], iteration_bounds = array<i64: 1>, scalar_prefetch = 0 : i64, scratch_operands = 0 : i64, tpu.core_type = #tpu.core_type<tc>, window_params = [{transform_indices = @transform_0, window_bounds = array<i64: 8, 16>}, {pipeline_mode = #tpu.pipeline_mode<synchronous>, transform_indices = @transform_1, window_bounds = array<i64: 7, 128, 128>}, {pipeline_mode = #tpu.pipeline_mode<synchronous>, transform_indices = @transform_2, window_bounds = array<i64: 7, 1, 128>}, {transform_indices = @transform_3, window_bounds = array<i64: 8, 128>}]} {
    %c0 = arith.constant 0 : index
    %c0_0 = arith.constant 0 : index
    %c0_1 = arith.constant 0 : index
    %0 = vector.load %arg2[%c0, %c0_0, %c0_1] : memref<7x128x128xf32, #tpu.memory_space<vmem>>, vector<1x128x128xf32>
    %1 = vector.shape_cast %0 : vector<1x128x128xf32> to vector<128x128xf32>
    %2 = vector.extract_strided_slice %1 {offsets = [0, 0], sizes = [16, 128], strides = [1, 1]} : vector<128x128xf32> to vector<16x128xf32>
    %c0_2 = arith.constant 0 : index
    %c0_3 = arith.constant 0 : index
    %3 = vector.load %arg1[%c0_2, %c0_3] : memref<8x16xf32, #tpu.memory_space<vmem>>, vector<8x16xf32>
    %cst = arith.constant dense<0.000000e+00> : vector<8x128xf32>
    %4 = tpu.matmul %3, %2, %cst {dimension_numbers = #tpu.dot_dimension_numbers<[1], [0], [0], [1], [0, 0, 1, 1], [], []>} : vector<8x16xf32>, vector<16x128xf32>, vector<8x128xf32> -> vector<8x128xf32>
    %c0_4 = arith.constant 0 : index
    %c0_5 = arith.constant 0 : index
    %c0_6 = arith.constant 0 : index
    %5 = vector.load %arg3[%c0_4, %c0_5, %c0_6] : memref<7x1x128xf32, #tpu.memory_space<vmem>>, vector<1x1x128xf32>
    %6 = vector.shape_cast %5 : vector<1x1x128xf32> to vector<1x128xf32>
    %7 = vector.broadcast %6 : vector<1x128xf32> to vector<8x128xf32>
    %8 = arith.addf %4, %7 : vector<8x128xf32>
    %cst_7 = arith.constant 0.000000e+00 : f32
    %9 = vector.broadcast %cst_7 : f32 to vector<8x128xf32>
    %10 = arith.maximumf %8, %9 : vector<8x128xf32>
    %c1 = arith.constant 1 : index
    %c0_8 = arith.constant 0 : index
    %c0_9 = arith.constant 0 : index
    %11 = vector.load %arg2[%c1, %c0_8, %c0_9] : memref<7x128x128xf32, #tpu.memory_space<vmem>>, vector<1x128x128xf32>
    %12 = vector.shape_cast %11 : vector<1x128x128xf32> to vector<128x128xf32>
    %cst_10 = arith.constant dense<0.000000e+00> : vector<8x128xf32>
    %13 = tpu.matmul %10, %12, %cst_10 {dimension_numbers = #tpu.dot_dimension_numbers<[1], [0], [0], [1], [0, 0, 1, 1], [], []>} : vector<8x128xf32>, vector<128x128xf32>, vector<8x128xf32> -> vector<8x128xf32>
    %c1_11 = arith.constant 1 : index
    %c0_12 = arith.constant 0 : index
    %c0_13 = arith.constant 0 : index
    %14 = vector.load %arg3[%c1_11, %c0_12, %c0_13] : memref<7x1x128xf32, #tpu.memory_space<vmem>>, vector<1x1x128xf32>
    %15 = vector.shape_cast %14 : vector<1x1x128xf32> to vector<1x128xf32>
    %16 = vector.broadcast %15 : vector<1x128xf32> to vector<8x128xf32>
    %17 = arith.addf %13, %16 : vector<8x128xf32>
    %cst_14 = arith.constant 0.000000e+00 : f32
    %18 = vector.broadcast %cst_14 : f32 to vector<8x128xf32>
    %19 = arith.maximumf %17, %18 : vector<8x128xf32>
    %c2 = arith.constant 2 : index
    %c0_15 = arith.constant 0 : index
    %c0_16 = arith.constant 0 : index
    %20 = vector.load %arg2[%c2, %c0_15, %c0_16] : memref<7x128x128xf32, #tpu.memory_space<vmem>>, vector<1x128x128xf32>
    %21 = vector.shape_cast %20 : vector<1x128x128xf32> to vector<128x128xf32>
    %cst_17 = arith.constant dense<0.000000e+00> : vector<8x128xf32>
    %22 = tpu.matmul %19, %21, %cst_17 {dimension_numbers = #tpu.dot_dimension_numbers<[1], [0], [0], [1], [0, 0, 1, 1], [], []>} : vector<8x128xf32>, vector<128x128xf32>, vector<8x128xf32> -> vector<8x128xf32>
    %c2_18 = arith.constant 2 : index
    %c0_19 = arith.constant 0 : index
    %c0_20 = arith.constant 0 : index
    %23 = vector.load %arg3[%c2_18, %c0_19, %c0_20] : memref<7x1x128xf32, #tpu.memory_space<vmem>>, vector<1x1x128xf32>
    %24 = vector.shape_cast %23 : vector<1x1x128xf32> to vector<1x128xf32>
    %25 = vector.broadcast %24 : vector<1x128xf32> to vector<8x128xf32>
    %26 = arith.addf %22, %25 : vector<8x128xf32>
    %cst_21 = arith.constant 0.000000e+00 : f32
    %27 = vector.broadcast %cst_21 : f32 to vector<8x128xf32>
    %28 = arith.maximumf %26, %27 : vector<8x128xf32>
    %c3 = arith.constant 3 : index
    %c0_22 = arith.constant 0 : index
    %c0_23 = arith.constant 0 : index
    %29 = vector.load %arg2[%c3, %c0_22, %c0_23] : memref<7x128x128xf32, #tpu.memory_space<vmem>>, vector<1x128x128xf32>
    %30 = vector.shape_cast %29 : vector<1x128x128xf32> to vector<128x128xf32>
    %cst_24 = arith.constant dense<0.000000e+00> : vector<8x128xf32>
    %31 = tpu.matmul %28, %30, %cst_24 {dimension_numbers = #tpu.dot_dimension_numbers<[1], [0], [0], [1], [0, 0, 1, 1], [], []>} : vector<8x128xf32>, vector<128x128xf32>, vector<8x128xf32> -> vector<8x128xf32>
    %c3_25 = arith.constant 3 : index
    %c0_26 = arith.constant 0 : index
    %c0_27 = arith.constant 0 : index
    %32 = vector.load %arg3[%c3_25, %c0_26, %c0_27] : memref<7x1x128xf32, #tpu.memory_space<vmem>>, vector<1x1x128xf32>
    %33 = vector.shape_cast %32 : vector<1x1x128xf32> to vector<1x128xf32>
    %34 = vector.broadcast %33 : vector<1x128xf32> to vector<8x128xf32>
    %35 = arith.addf %31, %34 : vector<8x128xf32>
    %cst_28 = arith.constant 0.000000e+00 : f32
    %36 = vector.broadcast %cst_28 : f32 to vector<8x128xf32>
    %37 = arith.maximumf %35, %36 : vector<8x128xf32>
    %c4 = arith.constant 4 : index
    %c0_29 = arith.constant 0 : index
    %c0_30 = arith.constant 0 : index
    %38 = vector.load %arg2[%c4, %c0_29, %c0_30] : memref<7x128x128xf32, #tpu.memory_space<vmem>>, vector<1x128x128xf32>
    %39 = vector.shape_cast %38 : vector<1x128x128xf32> to vector<128x128xf32>
    %cst_31 = arith.constant dense<0.000000e+00> : vector<8x128xf32>
    %40 = tpu.matmul %37, %39, %cst_31 {dimension_numbers = #tpu.dot_dimension_numbers<[1], [0], [0], [1], [0, 0, 1, 1], [], []>} : vector<8x128xf32>, vector<128x128xf32>, vector<8x128xf32> -> vector<8x128xf32>
    %c4_32 = arith.constant 4 : index
    %c0_33 = arith.constant 0 : index
    %c0_34 = arith.constant 0 : index
    %41 = vector.load %arg3[%c4_32, %c0_33, %c0_34] : memref<7x1x128xf32, #tpu.memory_space<vmem>>, vector<1x1x128xf32>
    %42 = vector.shape_cast %41 : vector<1x1x128xf32> to vector<1x128xf32>
    %43 = vector.broadcast %42 : vector<1x128xf32> to vector<8x128xf32>
    %44 = arith.addf %40, %43 : vector<8x128xf32>
    %cst_35 = arith.constant 0.000000e+00 : f32
    %45 = vector.broadcast %cst_35 : f32 to vector<8x128xf32>
    %46 = arith.maximumf %44, %45 : vector<8x128xf32>
    %c5 = arith.constant 5 : index
    %c0_36 = arith.constant 0 : index
    %c0_37 = arith.constant 0 : index
    %47 = vector.load %arg2[%c5, %c0_36, %c0_37] : memref<7x128x128xf32, #tpu.memory_space<vmem>>, vector<1x128x128xf32>
    %48 = vector.shape_cast %47 : vector<1x128x128xf32> to vector<128x128xf32>
    %cst_38 = arith.constant dense<0.000000e+00> : vector<8x128xf32>
    %49 = tpu.matmul %46, %48, %cst_38 {dimension_numbers = #tpu.dot_dimension_numbers<[1], [0], [0], [1], [0, 0, 1, 1], [], []>} : vector<8x128xf32>, vector<128x128xf32>, vector<8x128xf32> -> vector<8x128xf32>
    %c5_39 = arith.constant 5 : index
    %c0_40 = arith.constant 0 : index
    %c0_41 = arith.constant 0 : index
    %50 = vector.load %arg3[%c5_39, %c0_40, %c0_41] : memref<7x1x128xf32, #tpu.memory_space<vmem>>, vector<1x1x128xf32>
    %51 = vector.shape_cast %50 : vector<1x1x128xf32> to vector<1x128xf32>
    %52 = vector.broadcast %51 : vector<1x128xf32> to vector<8x128xf32>
    %53 = arith.addf %49, %52 : vector<8x128xf32>
    %cst_42 = arith.constant 0.000000e+00 : f32
    %54 = vector.broadcast %cst_42 : f32 to vector<8x128xf32>
    %55 = arith.maximumf %53, %54 : vector<8x128xf32>
    %c6 = arith.constant 6 : index
    %c0_43 = arith.constant 0 : index
    %c0_44 = arith.constant 0 : index
    %56 = vector.load %arg2[%c6, %c0_43, %c0_44] : memref<7x128x128xf32, #tpu.memory_space<vmem>>, vector<1x128x128xf32>
    %57 = vector.shape_cast %56 : vector<1x128x128xf32> to vector<128x128xf32>
    %cst_45 = arith.constant dense<0.000000e+00> : vector<8x128xf32>
    %58 = tpu.matmul %55, %57, %cst_45 {dimension_numbers = #tpu.dot_dimension_numbers<[1], [0], [0], [1], [0, 0, 1, 1], [], []>} : vector<8x128xf32>, vector<128x128xf32>, vector<8x128xf32> -> vector<8x128xf32>
    %c6_46 = arith.constant 6 : index
    %c0_47 = arith.constant 0 : index
    %c0_48 = arith.constant 0 : index
    %59 = vector.load %arg3[%c6_46, %c0_47, %c0_48] : memref<7x1x128xf32, #tpu.memory_space<vmem>>, vector<1x1x128xf32>
    %60 = vector.shape_cast %59 : vector<1x1x128xf32> to vector<1x128xf32>
    %61 = vector.broadcast %60 : vector<1x128xf32> to vector<8x128xf32>
    %62 = arith.addf %58, %61 : vector<8x128xf32>
    %c0_49 = arith.constant 0 : index
    %c0_50 = arith.constant 0 : index
    %63 = vector.load %arg4[%c0_49, %c0_50] : memref<8x128xf32, #tpu.memory_space<vmem>>, vector<8x128xf32>
    tpu.vector_store %arg4[%c0_49, %c0_50], %62 {strides = array<i32>} : memref<8x128xf32, #tpu.memory_space<vmem>>, vector<8x128xf32>,
    return
  }
  func.func @transform_0(%arg0: i32) -> (i32, i32) {
    %c0_i32 = arith.constant 0 : i32
    %c0_i32_0 = arith.constant 0 : i32
    return %arg0, %c0_i32 : i32, i32
  }
  func.func @transform_1(%arg0: i32) -> (i32, i32, i32) {
    %c0_i32 = arith.constant 0 : i32
    %c0_i32_0 = arith.constant 0 : i32
    %c0_i32_1 = arith.constant 0 : i32
    %c0_i32_2 = arith.constant 0 : i32
    return %c0_i32, %c0_i32_0, %c0_i32_1 : i32, i32, i32
  }
  func.func @transform_2(%arg0: i32) -> (i32, i32, i32) {
    %c0_i32 = arith.constant 0 : i32
    %c0_i32_0 = arith.constant 0 : i32
    %c0_i32_1 = arith.constant 0 : i32
    %c0_i32_2 = arith.constant 0 : i32
    return %c0_i32, %c0_i32_0, %c0_i32_1 : i32, i32, i32
  }
  func.func @transform_3(%arg0: i32) -> (i32, i32) {
    %c0_i32 = arith.constant 0 : i32
    %c0_i32_0 = arith.constant 0 : i32
    return %arg0, %c0_i32 : i32, i32
  }
}

</mosaic_0001>

<llo_original>
// kernel: tpu_custom_call.1
$region0: #{tpu_custom_call.1}
  #allocation0 [shape = 'u32[]', space=smem, size = 0x4, offset = 0x4, fixed_abs, tag = 'smem constant byte address 0x4 - core index']
  #allocation1 [shape = 'u32[144,128]{1,0:T(1,128)}', space=vmem, size = 0x12000, scoped, tag = 'internal scratch']
  %s0 = inlined_call_operand.hbm [shape: f32[8,16], index: 0, kind: input, shape index: {}]
  %s1 = inlined_call_operand.hbm [shape: f32[7,128,128], index: 1, kind: input, shape index: {}]
  %s2 = inlined_call_operand.vmem [shape: f32[7,1,128], index: 2, kind: input, shape index: {}]
  %s3 = inlined_call_operand.hbm [shape: f32[8,128], index: 3, kind: output, shape index: {}]
  %s4 = sld [smem:[#allocation0]]
  $region30: #{tpu_custom_call.1} parent=0
    _
  %s6 = ssub.s32 1, %s4
  %s7 = scalar_select 0, %s6, %s4
  $region1: #{tpu_custom_call.1} parent=0
    #allocation2 [shape = 'u8[4096]{0}', space=vmem, size = 0x1000, scoped, tag = 'input window, operand 0, single buffered']
    #allocation3 [shape = 's32[1]{0}', space=sflag, size = 0x4, scoped, tag = 'scoped memory for tpu_custom_call.1']
    #allocation4 [shape = 's32[1]{0}', space=sflag, size = 0x4, scoped, tag = 'scoped memory for tpu_custom_call.1']
    #allocation5 [shape = 'u8[458752]{0}', space=vmem, size = 0x70000, scoped, tag = 'input window, operand 1, single buffered']
    #allocation6 [shape = 's32[1]{0}', space=sflag, size = 0x4, scoped, tag = 'scoped memory for tpu_custom_call.1']
    #allocation7 [shape = 'u8[4096]{0}', space=vmem, size = 0x1000, scoped, tag = 'output window, operand 0, single buffered']
    %8 = vsyncpa [#allocation3], 0
    %9 = vsyncpa [#allocation6], 0
    %10 = vsyncpa [#allocation4], 0
    // Predicated region
    $region2: #{tpu_custom_call.1} parent=1 // pred_check
      _
    $region3: #{tpu_custom_call.1} parent=1 // pred_check_branch
      %12 = sbr.rel (0) target = $region5
    $region4: #{tpu_custom_call.1} parent=1 // pred_region
      %s14 = ssub.s32 128, 128
      %15 = vsyncadd [#allocation3], %s14
      %s17 = sshll.u32 [#allocation2], 4
      %s18 = int_to_ptr.vmem [resolvable:$true] %s17
      %20 = dma.hbm_to_vmem [thread:$0]  %s0, 128, %s18, [#allocation3]
    $region5: #{tpu_custom_call.1} parent=1 // pred_fallthru
      _
    // Predicated region
    $region6: #{tpu_custom_call.1} parent=1 // pred_check
      _
    $region7: #{tpu_custom_call.1} parent=1 // pred_check_branch
      %22 = sbr.rel (0) target = $region9
    $region8: #{tpu_custom_call.1} parent=1 // pred_region
      %s24 = ssub.s32 14336, 14336
      %25 = vsyncadd [#allocation6], %s24
      %s26 = sshll.u32 [#allocation5], 4
      %s27 = int_to_ptr.vmem [resolvable:$true] %s26
      %32 = dma.hbm_to_vmem [thread:$0]  %s1, 14336, %s27, [#allocation6], 128, 128, 8
    $region9: #{tpu_custom_call.1} parent=1 // pred_fallthru
      _
    // Predicated region
    $region10: #{tpu_custom_call.1} parent=1 // pred_check
      _
    $region11: #{tpu_custom_call.1} parent=1 // pred_check_branch
      %34 = sbr.rel (0) target = $region13
    $region12: #{tpu_custom_call.1} parent=1 // pred_region
      _
    $region13: #{tpu_custom_call.1} parent=1 // pred_fallthru
      _
    // Predicated region
    $region14: #{tpu_custom_call.1} parent=1 // pred_check
      _
    $region15: #{tpu_custom_call.1} parent=1 // pred_check_branch
      %36 = sbr.rel (0) target = $region17
    $region16: #{tpu_custom_call.1} parent=1 // pred_region
      %37 = dma.done [#allocation3], 128
    $region17: #{tpu_custom_call.1} parent=1 // pred_fallthru
      _
    // Predicated region
    $region18: #{tpu_custom_call.1} parent=1 // pred_check
      _
    $region19: #{tpu_custom_call.1} parent=1 // pred_check_branch
      %39 = sbr.rel (0) target = $region21
    $region20: #{tpu_custom_call.1} parent=1 // pred_region
      %40 = dma.done [#allocation6], 14336
    $region21: #{tpu_custom_call.1} parent=1 // pred_fallthru
      _
    %v41 = vld [vmem:[#allocation5] sm:$0xff]
    %v42 = vld [vmem:[#allocation5 + $0x8] sm:$0xff]
    %v43 = vld [vmem:[#allocation2] sm:$0xff]
    %v44 = vld [vmem:[%s2] sm:$0x1]
    %v46 = vlaneseq
    %v47 = vshrl.u32 %v46, 7
    %v48 = vsub.s32 0, %v47
    %v49 = vrot.slane %v44, %v48
    %vm51 = vcmask 130048
    %v53 = vsel %vm51, %v43, 0
    %55 = vmatprep.subr.mxu0 0.0
    %56 = vmatpush1.msra.mxu0 %v41
    %57 = vmatprep.subr.mxu0 0.0
    %58 = vmatpush1.msra.mxu0 %v42
    %59 = vmatprep.subr.mxu0 0.0
    %60 = vmatpush1.msra.mxu0 0.0
    %61 = vmatprep.subr.mxu0 0.0
    %62 = vmatpush1.msra.mxu0 0.0
    %63 = vmatprep.subr.mxu0 0.0
    %64 = vmatpush1.msra.mxu0 0.0
    %65 = vmatprep.subr.mxu0 0.0
    %66 = vmatpush1.msra.mxu0 0.0
    %67 = vmatprep.subr.mxu0 0.0
    %68 = vmatpush1.msra.mxu0 0.0
    %69 = vmatprep.subr.mxu0 0.0
    %70 = vmatpush1.msra.mxu0 0.0
    %71 = vmatprep.subr.mxu0 0.0
    %72 = vmatpush1.msra.mxu0 0.0
    %73 = vmatprep.subr.mxu0 0.0
    %74 = vmatpush1.msra.mxu0 0.0
    %75 = vmatprep.subr.mxu0 0.0
    %76 = vmatpush1.msra.mxu0 0.0
    %77 = vmatprep.subr.mxu0 0.0
    %78 = vmatpush1.msra.mxu0 0.0
    %79 = vmatprep.subr.mxu0 0.0
    %80 = vmatpush1.msra.mxu0 0.0
    %81 = vmatprep.subr.mxu0 0.0
    %82 = vmatpush1.msra.mxu0 0.0
    %83 = vmatprep.subr.mxu0 0.0
    %84 = vmatpush1.msra.mxu0 0.0
    %85 = vmatprep.subr.mxu0 0.0
    %86 = vmatpush1.msra.mxu0 0.0
    %87 = vmatprep.subr.mxu0 0.0
    %88 = vmatpush1.msra.mxu0 0.0
    %89 = vmatprep.subr.mxu0 0.0
    %90 = vmatpush1.msra.mxu0 0.0
    %91 = vmatprep.subr.mxu0 0.0
    %92 = vmatpush1.msra.mxu0 0.0
    %93 = vmatprep.subr.mxu0 0.0
    %94 = vmatpush1.msra.mxu0 0.0
    %95 = vmatprep.subr.mxu0 0.0
    %96 = vmatpush1.msra.mxu0 0.0
    %97 = vmatprep.subr.mxu0 0.0
    %98 = vmatpush1.msra.mxu0 0.0
    %99 = vmatprep.subr.mxu0 0.0
    %100 = vmatpush1.msra.mxu0 0.0
    %101 = vmatprep.subr.mxu0 0.0
    %102 = vmatpush1.msra.mxu0 0.0
    %103 = vmatprep.subr.mxu0 0.0
    %104 = vmatpush1.msra.mxu0 0.0
    %105 = vmatprep.subr.mxu0 0.0
    %106 = vmatpush1.msra.mxu0 0.0
    %107 = vmatprep.subr.mxu0 0.0
    %108 = vmatpush1.msra.mxu0 0.0
    %109 = vmatprep.subr.mxu0 0.0
    %110 = vmatpush1.msra.mxu0 0.0
    %111 = vmatprep.subr.mxu0 0.0
    %112 = vmatpush1.msra.mxu0 0.0
    %113 = vmatprep.subr.mxu0 0.0
    %114 = vmatpush1.msra.mxu0 0.0
    %115 = vmatprep.subr.mxu0 0.0
    %116 = vmatpush1.msra.mxu0 0.0
    %117 = vmatprep.subr.mxu0 0.0
    %118 = vmatpush1.msra.mxu0 0.0
    %119 = vmatprep.mubr.f32.mxu0 0.0
    %120 = vmatmul.mubr.f32.gmra.mrb[0].mxu0 %v53
    %v121 = vpop.f32.mrb[0].mxu0
    %v122 = vadd.f32 %v49, %v121
    %v123 = vpop.f32.mrb[0].mxu0
    %124 = vdwg.mxu0
    %v125 = vmax.f32 %v122, 0.0
    %s126 = scalar_lea.vmem [#allocation5], 128
    %v127 = vld [vmem:[%s126] sm:$0xff]
    %v128 = vld [vmem:[%s126 + $0x8] sm:$0xff]
    %v129 = vld [vmem:[%s126 + $0x10] sm:$0xff]
    %v130 = vld [vmem:[%s126 + $0x18] sm:$0xff]
    %v131 = vld [vmem:[%s126 + $0x20] sm:$0xff]
    %v132 = vld [vmem:[%s126 + $0x28] sm:$0xff]
    %v133 = vld [vmem:[%s126 + $0x30] sm:$0xff]
    %v134 = vld [vmem:[%s126 + $0x38] sm:$0xff]
    %v135 = vld [vmem:[%s126 + $0x40] sm:$0xff]
    %v136 = vld [vmem:[%s126 + $0x48] sm:$0xff]
    %v137 = vld [vmem:[%s126 + $0x50] sm:$0xff]
    %v138 = vld [vmem:[%s126 + $0x58] sm:$0xff]
    %v139 = vld [vmem:[%s126 + $0x60] sm:$0xff]
    %v140 = vld [vmem:[%s126 + $0x68] sm:$0xff]
    %v141 = vld [vmem:[%s126 + $0x70] sm:$0xff]
    %v142 = vld [vmem:[%s126 + $0x78] sm:$0xff]
    %s143 = scalar_lea.vmem %s2, 1
    %v144 = vld [vmem:[%s143] sm:$0x1]
    %v146 = vlaneseq
    %v147 = vshrl.u32 %v146, 7
    %v148 = vsub.s32 0, %v147
    %v149 = vrot.slane %v144, %v148
    %151 = vmatprep.subr.mxu0 0.0
    %152 = vmatpush1.msra.mxu0 %v127
    %153 = vmatprep.subr.mxu0 0.0
    %154 = vmatpush1.msra.mxu0 %v128
    %155 = vmatprep.subr.mxu0 0.0
    %156 = vmatpush1.msra.mxu0 %v129
    %157 = vmatprep.subr.mxu0 0.0
    %158 = vmatpush1.msra.mxu0 %v130
    %159 = vmatprep.subr.mxu0 0.0
    %160 = vmatpush1.msra.mxu0 %v131
    %161 = vmatprep.subr.mxu0 0.0
    %162 = vmatpush1.msra.mxu0 %v132
    %163 = vmatprep.subr.mxu0 0.0
    %164 = vmatpush1.msra.mxu0 %v133
    %165 = vmatprep.subr.mxu0 0.0
    %166 = vmatpush1.msra.mxu0 %v134
    %167 = vmatprep.subr.mxu0 0.0
    %168 = vmatpush1.msra.mxu0 %v135
    %169 = vmatprep.subr.mxu0 0.0
    %170 = vmatpush1.msra.mxu0 %v136
    %171 = vmatprep.subr.mxu0 0.0
    %172 = vmatpush1.msra.mxu0 %v137
    %173 = vmatprep.subr.mxu0 0.0
    %174 = vmatpush1.msra.mxu0 %v138
    %175 = vmatprep.subr.mxu0 0.0
    %176 = vmatpush1.msra.mxu0 %v139
    %177 = vmatprep.subr.mxu0 0.0
    %178 = vmatpush1.msra.mxu0 %v140
    %179 = vmatprep.subr.mxu0 0.0
    %180 = vmatpush1.msra.mxu0 %v141
    %181 = vmatprep.subr.mxu0 0.0
    %182 = vmatpush1.msra.mxu0 %v142
    %183 = vmatprep.subr.mxu0 0.0
    %184 = vmatpush1.msra.mxu0 0.0
    %185 = vmatprep.subr.mxu0 0.0
    %186 = vmatpush1.msra.mxu0 0.0
    %187 = vmatprep.subr.mxu0 0.0
    %188 = vmatpush1.msra.mxu0 0.0
    %189 = vmatprep.subr.mxu0 0.0
    %190 = vmatpush1.msra.mxu0 0.0
    %191 = vmatprep.subr.mxu0 0.0
    %192 = vmatpush1.msra.mxu0 0.0
    %193 = vmatprep.subr.mxu0 0.0
    %194 = vmatpush1.msra.mxu0 0.0
    %195 = vmatprep.subr.mxu0 0.0
    %196 = vmatpush1.msra.mxu0 0.0
    %197 = vmatprep.subr.mxu0 0.0
    %198 = vmatpush1.msra.mxu0 0.0
    %199 = vmatprep.subr.mxu0 0.0
    %200 = vmatpush1.msra.mxu0 0.0
    %201 = vmatprep.subr.mxu0 0.0
    %202 = vmatpush1.msra.mxu0 0.0
    %203 = vmatprep.subr.mxu0 0.0
    %204 = vmatpush1.msra.mxu0 0.0
    %205 = vmatprep.subr.mxu0 0.0
    %206 = vmatpush1.msra.mxu0 0.0
    %207 = vmatprep.subr.mxu0 0.0
    %208 = vmatpush1.msra.mxu0 0.0
    %209 = vmatprep.subr.mxu0 0.0
    %210 = vmatpush1.msra.mxu0 0.0
    %211 = vmatprep.subr.mxu0 0.0
    %212 = vmatpush1.msra.mxu0 0.0
    %213 = vmatprep.subr.mxu0 0.0
    %214 = vmatpush1.msra.mxu0 0.0
    %215 = vmatprep.mubr.f32.mxu0 0.0
    %216 = vmatmul.mubr.f32.gmra.mrb[0].mxu0 %v125
    %v217 = vpop.f32.mrb[0].mxu0
    %v218 = vadd.f32 %v149, %v217
    %v219 = vpop.f32.mrb[0].mxu0
    %220 = vdwg.mxu0
    %v221 = vmax.f32 %v218, 0.0
    %s222 = scalar_lea.vmem [#allocation5], 256
    %v223 = vld [vmem:[%s222] sm:$0xff]
    %v224 = vld [vmem:[%s222 + $0x8] sm:$0xff]
    %v225 = vld [vmem:[%s222 + $0x10] sm:$0xff]
    %v226 = vld [vmem:[%s222 + $0x18] sm:$0xff]
    %v227 = vld [vmem:[%s222 + $0x20] sm:$0xff]
    %v228 = vld [vmem:[%s222 + $0x28] sm:$0xff]
    %v229 = vld [vmem:[%s222 + $0x30] sm:$0xff]
    %v230 = vld [vmem:[%s222 + $0x38] sm:$0xff]
    %v231 = vld [vmem:[%s222 + $0x40] sm:$0xff]
    %v232 = vld [vmem:[%s222 + $0x48] sm:$0xff]
    %v233 = vld [vmem:[%s222 + $0x50] sm:$0xff]
    %v234 = vld [vmem:[%s222 + $0x58] sm:$0xff]
    %v235 = vld [vmem:[%s222 + $0x60] sm:$0xff]
    %v236 = vld [vmem:[%s222 + $0x68] sm:$0xff]
    %v237 = vld [vmem:[%s222 + $0x70] sm:$0xff]
    %v238 = vld [vmem:[%s222 + $0x78] sm:$0xff]
    %s239 = scalar_lea.vmem %s2, 2
    %v240 = vld [vmem:[%s239] sm:$0x1]
    %v242 = vlaneseq
    %v243 = vshrl.u32 %v242, 7
    %v244 = vsub.s32 0, %v243
    %v245 = vrot.slane %v240, %v244
    %247 = vmatprep.subr.mxu0 0.0
    %248 = vmatpush1.msra.mxu0 %v223
    %249 = vmatprep.subr.mxu0 0.0
    %250 = vmatpush1.msra.mxu0 %v224
    %251 = vmatprep.subr.mxu0 0.0
    %252 = vmatpush1.msra.mxu0 %v225
    %253 = vmatprep.subr.mxu0 0.0
    %254 = vmatpush1.msra.mxu0 %v226
    %255 = vmatprep.subr.mxu0 0.0
    %256 = vmatpush1.msra.mxu0 %v227
    %257 = vmatprep.subr.mxu0 0.0
    %258 = vmatpush1.msra.mxu0 %v228
    %259 = vmatprep.subr.mxu0 0.0
    %260 = vmatpush1.msra.mxu0 %v229
    %261 = vmatprep.subr.mxu0 0.0
    %262 = vmatpush1.msra.mxu0 %v230
    %263 = vmatprep.subr.mxu0 0.0
    %264 = vmatpush1.msra.mxu0 %v231
    %265 = vmatprep.subr.mxu0 0.0
    %266 = vmatpush1.msra.mxu0 %v232
    %267 = vmatprep.subr.mxu0 0.0
    %268 = vmatpush1.msra.mxu0 %v233
    %269 = vmatprep.subr.mxu0 0.0
    %270 = vmatpush1.msra.mxu0 %v234
    %271 = vmatprep.subr.mxu0 0.0
    %272 = vmatpush1.msra.mxu0 %v235
    %273 = vmatprep.subr.mxu0 0.0
    %274 = vmatpush1.msra.mxu0 %v236
    %275 = vmatprep.subr.mxu0 0.0
    %276 = vmatpush1.msra.mxu0 %v237
    %277 = vmatprep.subr.mxu0 0.0
    %278 = vmatpush1.msra.mxu0 %v238
    %279 = vmatprep.subr.mxu0 0.0
    %280 = vmatpush1.msra.mxu0 0.0
    %281 = vmatprep.subr.mxu0 0.0
    %282 = vmatpush1.msra.mxu0 0.0
    %283 = vmatprep.subr.mxu0 0.0
    %284 = vmatpush1.msra.mxu0 0.0
    %285 = vmatprep.subr.mxu0 0.0
    %286 = vmatpush1.msra.mxu0 0.0
    %287 = vmatprep.subr.mxu0 0.0
    %288 = vmatpush1.msra.mxu0 0.0
    %289 = vmatprep.subr.mxu0 0.0
    %290 = vmatpush1.msra.mxu0 0.0
    %291 = vmatprep.subr.mxu0 0.0
    %292 = vmatpush1.msra.mxu0 0.0
    %293 = vmatprep.subr.mxu0 0.0
    %294 = vmatpush1.msra.mxu0 0.0
    %295 = vmatprep.subr.mxu0 0.0
    %296 = vmatpush1.msra.mxu0 0.0
    %297 = vmatprep.subr.mxu0 0.0
    %298 = vmatpush1.msra.mxu0 0.0
    %299 = vmatprep.subr.mxu0 0.0
    %300 = vmatpush1.msra.mxu0 0.0
    %301 = vmatprep.subr.mxu0 0.0
    %302 = vmatpush1.msra.mxu0 0.0
    %303 = vmatprep.subr.mxu0 0.0
    %304 = vmatpush1.msra.mxu0 0.0
    %305 = vmatprep.subr.mxu0 0.0
    %306 = vmatpush1.msra.mxu0 0.0
    %307 = vmatprep.subr.mxu0 0.0
    %308 = vmatpush1.msra.mxu0 0.0
    %309 = vmatprep.subr.mxu0 0.0
    %310 = vmatpush1.msra.mxu0 0.0
    %311 = vmatprep.mubr.f32.mxu0 0.0
    %312 = vmatmul.mubr.f32.gmra.mrb[0].mxu0 %v221
    %v313 = vpop.f32.mrb[0].mxu0
    %v314 = vadd.f32 %v245, %v313
    %v315 = vpop.f32.mrb[0].mxu0
    %316 = vdwg.mxu0
    %v317 = vmax.f32 %v314, 0.0
    %s318 = scalar_lea.vmem [#allocation5], 384
    %v319 = vld [vmem:[%s318] sm:$0xff]
    %v320 = vld [vmem:[%s318 + $0x8] sm:$0xff]
    %v321 = vld [vmem:[%s318 + $0x10] sm:$0xff]
    %v322 = vld [vmem:[%s318 + $0x18] sm:$0xff]
    %v323 = vld [vmem:[%s318 + $0x20] sm:$0xff]
    %v324 = vld [vmem:[%s318 + $0x28] sm:$0xff]
    %v325 = vld [vmem:[%s318 + $0x30] sm:$0xff]
    %v326 = vld [vmem:[%s318 + $0x38] sm:$0xff]
    %v327 = vld [vmem:[%s318 + $0x40] sm:$0xff]
    %v328 = vld [vmem:[%s318 + $0x48] sm:$0xff]
    %v329 = vld [vmem:[%s318 + $0x50] sm:$0xff]
    %v330 = vld [vmem:[%s318 + $0x58] sm:$0xff]
    %v331 = vld [vmem:[%s318 + $0x60] sm:$0xff]
    %v332 = vld [vmem:[%s318 + $0x68] sm:$0xff]
    %v333 = vld [vmem:[%s318 + $0x70] sm:$0xff]
    %v334 = vld [vmem:[%s318 + $0x78] sm:$0xff]
    %s335 = scalar_lea.vmem %s2, 3
    %v336 = vld [vmem:[%s335] sm:$0x1]
    %v338 = vlaneseq
    %v339 = vshrl.u32 %v338, 7
    %v340 = vsub.s32 0, %v339
    %v341 = vrot.slane %v336, %v340
    %343 = vmatprep.subr.mxu0 0.0
    %344 = vmatpush1.msra.mxu0 %v319
    %345 = vmatprep.subr.mxu0 0.0
    %346 = vmatpush1.msra.mxu0 %v320
    %347 = vmatprep.subr.mxu0 0.0
    %348 = vmatpush1.msra.mxu0 %v321
    %349 = vmatprep.subr.mxu0 0.0
    %350 = vmatpush1.msra.mxu0 %v322
    %351 = vmatprep.subr.mxu0 0.0
    %352 = vmatpush1.msra.mxu0 %v323
    %353 = vmatprep.subr.mxu0 0.0
    %354 = vmatpush1.msra.mxu0 %v324
    %355 = vmatprep.subr.mxu0 0.0
    %356 = vmatpush1.msra.mxu0 %v325
    %357 = vmatprep.subr.mxu0 0.0
    %358 = vmatpush1.msra.mxu0 %v326
    %359 = vmatprep.subr.mxu0 0.0
    %360 = vmatpush1.msra.mxu0 %v327
    %361 = vmatprep.subr.mxu0 0.0
    %362 = vmatpush1.msra.mxu0 %v328
    %363 = vmatprep.subr.mxu0 0.0
    %364 = vmatpush1.msra.mxu0 %v329
    %365 = vmatprep.subr.mxu0 0.0
    %366 = vmatpush1.msra.mxu0 %v330
    %367 = vmatprep.subr.mxu0 0.0
    %368 = vmatpush1.msra.mxu0 %v331
    %369 = vmatprep.subr.mxu0 0.0
    %370 = vmatpush1.msra.mxu0 %v332
    %371 = vmatprep.subr.mxu0 0.0
    %372 = vmatpush1.msra.mxu0 %v333
    %373 = vmatprep.subr.mxu0 0.0
    %374 = vmatpush1.msra.mxu0 %v334
    %375 = vmatprep.subr.mxu0 0.0
    %376 = vmatpush1.msra.mxu0 0.0
    %377 = vmatprep.subr.mxu0 0.0
    %378 = vmatpush1.msra.mxu0 0.0
    %379 = vmatprep.subr.mxu0 0.0
    %380 = vmatpush1.msra.mxu0 0.0
    %381 = vmatprep.subr.mxu0 0.0
    %382 = vmatpush1.msra.mxu0 0.0
    %383 = vmatprep.subr.mxu0 0.0
    %384 = vmatpush1.msra.mxu0 0.0
    %385 = vmatprep.subr.mxu0 0.0
    %386 = vmatpush1.msra.mxu0 0.0
    %387 = vmatprep.subr.mxu0 0.0
    %388 = vmatpush1.msra.mxu0 0.0
    %389 = vmatprep.subr.mxu0 0.0
    %390 = vmatpush1.msra.mxu0 0.0
    %391 = vmatprep.subr.mxu0 0.0
    %392 = vmatpush1.msra.mxu0 0.0
    %393 = vmatprep.subr.mxu0 0.0
    %394 = vmatpush1.msra.mxu0 0.0
    %395 = vmatprep.subr.mxu0 0.0
    %396 = vmatpush1.msra.mxu0 0.0
    %397 = vmatprep.subr.mxu0 0.0
    %398 = vmatpush1.msra.mxu0 0.0
    %399 = vmatprep.subr.mxu0 0.0
    %400 = vmatpush1.msra.mxu0 0.0
    %401 = vmatprep.subr.mxu0 0.0
    %402 = vmatpush1.msra.mxu0 0.0
    %403 = vmatprep.subr.mxu0 0.0
    %404 = vmatpush1.msra.mxu0 0.0
    %405 = vmatprep.subr.mxu0 0.0
    %406 = vmatpush1.msra.mxu0 0.0
    %407 = vmatprep.mubr.f32.mxu0 0.0
    %408 = vmatmul.mubr.f32.gmra.mrb[0].mxu0 %v317
    %v409 = vpop.f32.mrb[0].mxu0
    %v410 = vadd.f32 %v341, %v409
    %v411 = vpop.f32.mrb[0].mxu0
    %412 = vdwg.mxu0
    %v413 = vmax.f32 %v410, 0.0
    %s414 = scalar_lea.vmem [#allocation5], 512
    %v415 = vld [vmem:[%s414] sm:$0xff]
    %v416 = vld [vmem:[%s414 + $0x8] sm:$0xff]
    %v417 = vld [vmem:[%s414 + $0x10] sm:$0xff]
    %v418 = vld [vmem:[%s414 + $0x18] sm:$0xff]
    %v419 = vld [vmem:[%s414 + $0x20] sm:$0xff]
    %v420 = vld [vmem:[%s414 + $0x28] sm:$0xff]
    %v421 = vld [vmem:[%s414 + $0x30] sm:$0xff]
    %v422 = vld [vmem:[%s414 + $0x38] sm:$0xff]
    %v423 = vld [vmem:[%s414 + $0x40] sm:$0xff]
    %v424 = vld [vmem:[%s414 + $0x48] sm:$0xff]
    %v425 = vld [vmem:[%s414 + $0x50] sm:$0xff]
    %v426 = vld [vmem:[%s414 + $0x58] sm:$0xff]
    %v427 = vld [vmem:[%s414 + $0x60] sm:$0xff]
    %v428 = vld [vmem:[%s414 + $0x68] sm:$0xff]
    %v429 = vld [vmem:[%s414 + $0x70] sm:$0xff]
    %v430 = vld [vmem:[%s414 + $0x78] sm:$0xff]
    %s431 = scalar_lea.vmem %s2, 4
    %v432 = vld [vmem:[%s431] sm:$0x1]
    %v434 = vlaneseq
    %v435 = vshrl.u32 %v434, 7
    %v436 = vsub.s32 0, %v435
    %v437 = vrot.slane %v432, %v436
    %439 = vmatprep.subr.mxu0 0.0
    %440 = vmatpush1.msra.mxu0 %v415
    %441 = vmatprep.subr.mxu0 0.0
    %442 = vmatpush1.msra.mxu0 %v416
    %443 = vmatprep.subr.mxu0 0.0
    %444 = vmatpush1.msra.mxu0 %v417
    %445 = vmatprep.subr.mxu0 0.0
    %446 = vmatpush1.msra.mxu0 %v418
    %447 = vmatprep.subr.mxu0 0.0
    %448 = vmatpush1.msra.mxu0 %v419
    %449 = vmatprep.subr.mxu0 0.0
    %450 = vmatpush1.msra.mxu0 %v420
    %451 = vmatprep.subr.mxu0 0.0
    %452 = vmatpush1.msra.mxu0 %v421
    %453 = vmatprep.subr.mxu0 0.0
    %454 = vmatpush1.msra.mxu0 %v422
    %455 = vmatprep.subr.mxu0 0.0
    %456 = vmatpush1.msra.mxu0 %v423
    %457 = vmatprep.subr.mxu0 0.0
    %458 = vmatpush1.msra.mxu0 %v424
    %459 = vmatprep.subr.mxu0 0.0
    %460 = vmatpush1.msra.mxu0 %v425
    %461 = vmatprep.subr.mxu0 0.0
    %462 = vmatpush1.msra.mxu0 %v426
    %463 = vmatprep.subr.mxu0 0.0
    %464 = vmatpush1.msra.mxu0 %v427
    %465 = vmatprep.subr.mxu0 0.0
    %466 = vmatpush1.msra.mxu0 %v428
    %467 = vmatprep.subr.mxu0 0.0
    %468 = vmatpush1.msra.mxu0 %v429
    %469 = vmatprep.subr.mxu0 0.0
    %470 = vmatpush1.msra.mxu0 %v430
    %471 = vmatprep.subr.mxu0 0.0
    %472 = vmatpush1.msra.mxu0 0.0
    %473 = vmatprep.subr.mxu0 0.0
    %474 = vmatpush1.msra.mxu0 0.0
    %475 = vmatprep.subr.mxu0 0.0
    %476 = vmatpush1.msra.mxu0 0.0
    %477 = vmatprep.subr.mxu0 0.0
    %478 = vmatpush1.msra.mxu0 0.0
    %479 = vmatprep.subr.mxu0 0.0
    %480 = vmatpush1.msra.mxu0 0.0
    %481 = vmatprep.subr.mxu0 0.0
    %482 = vmatpush1.msra.mxu0 0.0
    %483 = vmatprep.subr.mxu0 0.0
    %484 = vmatpush1.msra.mxu0 0.0
    %485 = vmatprep.subr.mxu0 0.0
    %486 = vmatpush1.msra.mxu0 0.0
    %487 = vmatprep.subr.mxu0 0.0
    %488 = vmatpush1.msra.mxu0 0.0
    %489 = vmatprep.subr.mxu0 0.0
    %490 = vmatpush1.msra.mxu0 0.0
    %491 = vmatprep.subr.mxu0 0.0
    %492 = vmatpush1.msra.mxu0 0.0
    %493 = vmatprep.subr.mxu0 0.0
    %494 = vmatpush1.msra.mxu0 0.0
    %495 = vmatprep.subr.mxu0 0.0
    %496 = vmatpush1.msra.mxu0 0.0
    %497 = vmatprep.subr.mxu0 0.0
    %498 = vmatpush1.msra.mxu0 0.0
    %499 = vmatprep.subr.mxu0 0.0
    %500 = vmatpush1.msra.mxu0 0.0
    %501 = vmatprep.subr.mxu0 0.0
    %502 = vmatpush1.msra.mxu0 0.0
    %503 = vmatprep.mubr.f32.mxu0 0.0
    %504 = vmatmul.mubr.f32.gmra.mrb[0].mxu0 %v413
    %v505 = vpop.f32.mrb[0].mxu0
    %v506 = vadd.f32 %v437, %v505
    %v507 = vpop.f32.mrb[0].mxu0
    %508 = vdwg.mxu0
    %v509 = vmax.f32 %v506, 0.0
    %s510 = scalar_lea.vmem [#allocation5], 640
    %v511 = vld [vmem:[%s510] sm:$0xff]
    %v512 = vld [vmem:[%s510 + $0x8] sm:$0xff]
    %v513 = vld [vmem:[%s510 + $0x10] sm:$0xff]
    %v514 = vld [vmem:[%s510 + $0x18] sm:$0xff]
    %v515 = vld [vmem:[%s510 + $0x20] sm:$0xff]
    %v516 = vld [vmem:[%s510 + $0x28] sm:$0xff]
    %v517 = vld [vmem:[%s510 + $0x30] sm:$0xff]
    %v518 = vld [vmem:[%s510 + $0x38] sm:$0xff]
    %v519 = vld [vmem:[%s510 + $0x40] sm:$0xff]
    %v520 = vld [vmem:[%s510 + $0x48] sm:$0xff]
    %v521 = vld [vmem:[%s510 + $0x50] sm:$0xff]
    %v522 = vld [vmem:[%s510 + $0x58] sm:$0xff]
    %v523 = vld [vmem:[%s510 + $0x60] sm:$0xff]
    %v524 = vld [vmem:[%s510 + $0x68] sm:$0xff]
    %v525 = vld [vmem:[%s510 + $0x70] sm:$0xff]
    %v526 = vld [vmem:[%s510 + $0x78] sm:$0xff]
    %s527 = scalar_lea.vmem %s2, 5
    %v528 = vld [vmem:[%s527] sm:$0x1]
    %v530 = vlaneseq
    %v531 = vshrl.u32 %v530, 7
    %v532 = vsub.s32 0, %v531
    %v533 = vrot.slane %v528, %v532
    %535 = vmatprep.subr.mxu0 0.0
    %536 = vmatpush1.msra.mxu0 %v511
    %537 = vmatprep.subr.mxu0 0.0
    %538 = vmatpush1.msra.mxu0 %v512
    %539 = vmatprep.subr.mxu0 0.0
    %540 = vmatpush1.msra.mxu0 %v513
    %541 = vmatprep.subr.mxu0 0.0
    %542 = vmatpush1.msra.mxu0 %v514
    %543 = vmatprep.subr.mxu0 0.0
    %544 = vmatpush1.msra.mxu0 %v515
    %545 = vmatprep.subr.mxu0 0.0
    %546 = vmatpush1.msra.mxu0 %v516
    %547 = vmatprep.subr.mxu0 0.0
    %548 = vmatpush1.msra.mxu0 %v517
    %549 = vmatprep.subr.mxu0 0.0
    %550 = vmatpush1.msra.mxu0 %v518
    %551 = vmatprep.subr.mxu0 0.0
    %552 = vmatpush1.msra.mxu0 %v519
    %553 = vmatprep.subr.mxu0 0.0
    %554 = vmatpush1.msra.mxu0 %v520
    %555 = vmatprep.subr.mxu0 0.0
    %556 = vmatpush1.msra.mxu0 %v521
    %557 = vmatprep.subr.mxu0 0.0
    %558 = vmatpush1.msra.mxu0 %v522
    %559 = vmatprep.subr.mxu0 0.0
    %560 = vmatpush1.msra.mxu0 %v523
    %561 = vmatprep.subr.mxu0 0.0
    %562 = vmatpush1.msra.mxu0 %v524
    %563 = vmatprep.subr.mxu0 0.0
    %564 = vmatpush1.msra.mxu0 %v525
    %565 = vmatprep.subr.mxu0 0.0
    %566 = vmatpush1.msra.mxu0 %v526
    %567 = vmatprep.subr.mxu0 0.0
    %568 = vmatpush1.msra.mxu0 0.0
    %569 = vmatprep.subr.mxu0 0.0
    %570 = vmatpush1.msra.mxu0 0.0
    %571 = vmatprep.subr.mxu0 0.0
    %572 = vmatpush1.msra.mxu0 0.0
    %573 = vmatprep.subr.mxu0 0.0
    %574 = vmatpush1.msra.mxu0 0.0
    %575 = vmatprep.subr.mxu0 0.0
    %576 = vmatpush1.msra.mxu0 0.0
    %577 = vmatprep.subr.mxu0 0.0
    %578 = vmatpush1.msra.mxu0 0.0
    %579 = vmatprep.subr.mxu0 0.0
    %580 = vmatpush1.msra.mxu0 0.0
    %581 = vmatprep.subr.mxu0 0.0
    %582 = vmatpush1.msra.mxu0 0.0
    %583 = vmatprep.subr.mxu0 0.0
    %584 = vmatpush1.msra.mxu0 0.0
    %585 = vmatprep.subr.mxu0 0.0
    %586 = vmatpush1.msra.mxu0 0.0
    %587 = vmatprep.subr.mxu0 0.0
    %588 = vmatpush1.msra.mxu0 0.0
    %589 = vmatprep.subr.mxu0 0.0
    %590 = vmatpush1.msra.mxu0 0.0
    %591 = vmatprep.subr.mxu0 0.0
    %592 = vmatpush1.msra.mxu0 0.0
    %593 = vmatprep.subr.mxu0 0.0
    %594 = vmatpush1.msra.mxu0 0.0
    %595 = vmatprep.subr.mxu0 0.0
    %596 = vmatpush1.msra.mxu0 0.0
    %597 = vmatprep.subr.mxu0 0.0
    %598 = vmatpush1.msra.mxu0 0.0
    %599 = vmatprep.mubr.f32.mxu0 0.0
    %600 = vmatmul.mubr.f32.gmra.mrb[0].mxu0 %v509
    %v601 = vpop.f32.mrb[0].mxu0
    %v602 = vadd.f32 %v533, %v601
    %v603 = vpop.f32.mrb[0].mxu0
    %604 = vdwg.mxu0
    %v605 = vmax.f32 %v602, 0.0
    %s606 = scalar_lea.vmem [#allocation5], 768
    %v607 = vld [vmem:[%s606] sm:$0xff]
    %v608 = vld [vmem:[%s606 + $0x8] sm:$0xff]
    %v609 = vld [vmem:[%s606 + $0x10] sm:$0xff]
    %v610 = vld [vmem:[%s606 + $0x18] sm:$0xff]
    %v611 = vld [vmem:[%s606 + $0x20] sm:$0xff]
    %v612 = vld [vmem:[%s606 + $0x28] sm:$0xff]
    %v613 = vld [vmem:[%s606 + $0x30] sm:$0xff]
    %v614 = vld [vmem:[%s606 + $0x38] sm:$0xff]
    %v615 = vld [vmem:[%s606 + $0x40] sm:$0xff]
    %v616 = vld [vmem:[%s606 + $0x48] sm:$0xff]
    %v617 = vld [vmem:[%s606 + $0x50] sm:$0xff]
    %v618 = vld [vmem:[%s606 + $0x58] sm:$0xff]
    %v619 = vld [vmem:[%s606 + $0x60] sm:$0xff]
    %v620 = vld [vmem:[%s606 + $0x68] sm:$0xff]
    %v621 = vld [vmem:[%s606 + $0x70] sm:$0xff]
    %v622 = vld [vmem:[%s606 + $0x78] sm:$0xff]
    %s623 = scalar_lea.vmem %s2, 6
    %v624 = vld [vmem:[%s623] sm:$0x1]
    %v626 = vlaneseq
    %v627 = vshrl.u32 %v626, 7
    %v628 = vsub.s32 0, %v627
    %v629 = vrot.slane %v624, %v628
    %631 = vmatprep.subr.mxu0 0.0
    %632 = vmatpush1.msra.mxu0 %v607
    %633 = vmatprep.subr.mxu0 0.0
    %634 = vmatpush1.msra.mxu0 %v608
    %635 = vmatprep.subr.mxu0 0.0
    %636 = vmatpush1.msra.mxu0 %v609
    %637 = vmatprep.subr.mxu0 0.0
    %638 = vmatpush1.msra.mxu0 %v610
    %639 = vmatprep.subr.mxu0 0.0
    %640 = vmatpush1.msra.mxu0 %v611
    %641 = vmatprep.subr.mxu0 0.0
    %642 = vmatpush1.msra.mxu0 %v612
    %643 = vmatprep.subr.mxu0 0.0
    %644 = vmatpush1.msra.mxu0 %v613
    %645 = vmatprep.subr.mxu0 0.0
    %646 = vmatpush1.msra.mxu0 %v614
    %647 = vmatprep.subr.mxu0 0.0
    %648 = vmatpush1.msra.mxu0 %v615
    %649 = vmatprep.subr.mxu0 0.0
    %650 = vmatpush1.msra.mxu0 %v616
    %651 = vmatprep.subr.mxu0 0.0
    %652 = vmatpush1.msra.mxu0 %v617
    %653 = vmatprep.subr.mxu0 0.0
    %654 = vmatpush1.msra.mxu0 %v618
    %655 = vmatprep.subr.mxu0 0.0
    %656 = vmatpush1.msra.mxu0 %v619
    %657 = vmatprep.subr.mxu0 0.0
    %658 = vmatpush1.msra.mxu0 %v620
    %659 = vmatprep.subr.mxu0 0.0
    %660 = vmatpush1.msra.mxu0 %v621
    %661 = vmatprep.subr.mxu0 0.0
    %662 = vmatpush1.msra.mxu0 %v622
    %663 = vmatprep.subr.mxu0 0.0
    %664 = vmatpush1.msra.mxu0 0.0
    %665 = vmatprep.subr.mxu0 0.0
    %666 = vmatpush1.msra.mxu0 0.0
    %667 = vmatprep.subr.mxu0 0.0
    %668 = vmatpush1.msra.mxu0 0.0
    %669 = vmatprep.subr.mxu0 0.0
    %670 = vmatpush1.msra.mxu0 0.0
    %671 = vmatprep.subr.mxu0 0.0
    %672 = vmatpush1.msra.mxu0 0.0
    %673 = vmatprep.subr.mxu0 0.0
    %674 = vmatpush1.msra.mxu0 0.0
    %675 = vmatprep.subr.mxu0 0.0
    %676 = vmatpush1.msra.mxu0 0.0
    %677 = vmatprep.subr.mxu0 0.0
    %678 = vmatpush1.msra.mxu0 0.0
    %679 = vmatprep.subr.mxu0 0.0
    %680 = vmatpush1.msra.mxu0 0.0
    %681 = vmatprep.subr.mxu0 0.0
    %682 = vmatpush1.msra.mxu0 0.0
    %683 = vmatprep.subr.mxu0 0.0
    %684 = vmatpush1.msra.mxu0 0.0
    %685 = vmatprep.subr.mxu0 0.0
    %686 = vmatpush1.msra.mxu0 0.0
    %687 = vmatprep.subr.mxu0 0.0
    %688 = vmatpush1.msra.mxu0 0.0
    %689 = vmatprep.subr.mxu0 0.0
    %690 = vmatpush1.msra.mxu0 0.0
    %691 = vmatprep.subr.mxu0 0.0
    %692 = vmatpush1.msra.mxu0 0.0
    %693 = vmatprep.subr.mxu0 0.0
    %694 = vmatpush1.msra.mxu0 0.0
    %695 = vmatprep.mubr.f32.mxu0 0.0
    %696 = vmatmul.mubr.f32.gmra.mrb[0].mxu0 %v605
    %v697 = vpop.f32.mrb[0].mxu0
    %v698 = vadd.f32 %v629, %v697
    %v699 = vpop.f32.mrb[0].mxu0
    %700 = vdwg.mxu0
    %701 = vst [vmem:[#allocation7] sm:$0xff] %v698
    // Predicated region
    $region22: #{tpu_custom_call.1} parent=1 // pred_check
      _
    $region23: #{tpu_custom_call.1} parent=1 // pred_check_branch
      %703 = sbr.rel (0) target = $region25
    $region24: #{tpu_custom_call.1} parent=1 // pred_region
      %s705 = ssub.s32 128, 128
      %706 = vsyncadd [#allocation4], %s705
      %s708 = sshll.u32 [#allocation7], 4
      %s709 = int_to_ptr.vmem [resolvable:$true] %s708
      %711 = dma.vmem_to_hbm [thread:$0]  %s709, 128, %s3, [#allocation4]
    $region25: #{tpu_custom_call.1} parent=1 // pred_fallthru
      _
    // Predicated region
    $region26: #{tpu_custom_call.1} parent=1 // pred_check
      _
    $region27: #{tpu_custom_call.1} parent=1 // pred_check_branch
      %713 = sbr.rel (0) target = $region29
    $region28: #{tpu_custom_call.1} parent=1 // pred_region
      %714 = dma.done [#allocation4], 128
    $region29: #{tpu_custom_call.1} parent=1 // pred_fallthru
      _
    %715 = vsyncpa [#allocation3], 1
    %716 = vsyncpa [#allocation6], 1
    %717 = vsyncpa [#allocation4], 1

</llo_original>
